<compile_context>
chip_gen: v5e
topology: v5e:2x2
jax: 0.10.0
libtpu: 0.0.40
codegen_flags: <defaults>
</compile_context>

<pallas_src>
import math
import jax
import jax.numpy as jnp
from jax.experimental import pallas as pl
from jax.experimental.pallas import tpu as pltpu

LANE = 128
MATMUL_DTYPE = jnp.bfloat16


def _round_up(x, m):
    return ((x + m - 1) // m) * m


# ---------------------------------------------------------------------------
# Fused kernel: (linear + relu) * (L-1), then linear + log_softmax
# ---------------------------------------------------------------------------

def _make_fused_mlp_kernel(num_layers):
    """Ref layout: (x_ref, w_0, b_0, ..., w_{L-1}, b_{L-1}, o_ref).

    x_ref / w_i are bf16 (pre-cast in the wrapper); biases are f32; the MXU
    accumulates in f32.  Hidden activations stay on-chip as plain values.
    """

    def kernel(*refs):
        x_ref, o_ref = refs[0], refs[-1]
        wb_refs = refs[1:-1]

        h = x_ref[...]                               # bf16 (block_b, K0_pad)
        for layer in range(num_layers):
            w_ref = wb_refs[2 * layer]
            b_ref = wb_refs[2 * layer + 1]
            # MXU: bf16 operands, f32 accumulation.
            y = jnp.dot(h, w_ref[...], preferred_element_type=jnp.float32)
            y = y + b_ref[...]                       # f32 VPU (correct on v5e too)
            if layer < num_layers - 1:
                # ReLU (dropout = identity in eval); single downcast fused with
                # the ReLU feeds the next MXU pass.  Zero-padded lanes stay 0.
                h = jnp.maximum(y, 0.0).astype(MATMUL_DTYPE)
            else:
                # Numerically stable log_softmax over the (unpadded) class axis.
                # NOTE: if B is not a multiple of block_b, the padded rows of the
                # last tile run exp/log on undefined data; those rows are
                # discarded by Pallas, so any inf/NaN there is harmless.
                m = jnp.max(y, axis=-1, keepdims=True)
                s = y - m
                lse = jnp.log(jnp.sum(jnp.exp(s), axis=-1, keepdims=True))
                o_ref[...] = s - lse

    return kernel


# ---------------------------------------------------------------------------
# One-time parameter prep: pad hidden dims to 128 lanes, cast weights to bf16
# ---------------------------------------------------------------------------

def prepare_params(params):
    """params: list of (W:(in,out) f32, b:(1,out) f32) with W already (in, out).

    Returns padded/cast params:
      * every hidden in/out dim rounded up to a multiple of 128 (zero-filled),
      * the final output dim left untouched (so log_softmax stays exact),
      * weights in bf16, biases in f32.
    Zero-padding is exact: padded hidden columns get bias 0 -> relu(0)=0, and
    the corresponding padded input rows of the next weight are 0.
    """
    num_layers = len(params)
    prepped = []
    for idx, (w, b) in enumerate(params):
        k_in, n = w.shape
        k_pad = _round_up(k_in, LANE)
        n_pad = n if idx == num_layers - 1 else _round_up(n, LANE)
        wp = jnp.zeros((k_pad, n_pad), MATMUL_DTYPE).at[:k_in, :n].set(
            w.astype(MATMUL_DTYPE))
        bp = jnp.zeros((1, n_pad), jnp.float32).at[:, :n].set(
            b.astype(jnp.float32))
        prepped.append((wp, bp))
    return prepped


# ---------------------------------------------------------------------------
# Wrapper: one fused pallas_call over the whole network
# ---------------------------------------------------------------------------

def _pick_block_b(B):
    """Big batch tiles (>=512 rows) amortize per-step overhead and hit the HBM
    roofline; for large B keep >= 2 parallel grid steps so v7x's 2 TensorCores
    both get work.  At small B (the demo) it collapses to a single step."""
    if B <= 512:
        return B                              # full-dim block, grid=(1,)
    half = -(-B // 2)                         # ceil(B/2)
    half = _round_up(half, 8)                 # sublane-aligned tile
    return min(1024, half)


def fc_net_forward(prepped_params, x):
    B = x.shape[0]
    num_layers = len(prepped_params)
    k0_pad = prepped_params[0][0].shape[0]
    n_out = prepped_params[-1][0].shape[1]

    # Cast input to bf16 and zero-pad its feature dim to the padded K0.
    xk = x.shape[1]
    x_bf = x.astype(MATMUL_DTYPE)
    if xk != k0_pad:
        x_bf = jnp.zeros((B, k0_pad), MATMUL_DTYPE).at[:, :xk].set(x_bf)

    block_b = _pick_block_b(B)
    grid = (pl.cdiv(B, block_b),)

    in_specs = [pl.BlockSpec((block_b, k0_pad), lambda i: (i, 0))]
    for w, b in prepped_params:
        k_in, n = w.shape
        in_specs.append(pl.BlockSpec((k_in, n), lambda i: (0, 0)))   # whole weight
        in_specs.append(pl.BlockSpec((1, n), lambda i: (0, 0)))      # whole bias
    out_specs = pl.BlockSpec((block_b, n_out), lambda i: (i, 0))

    # Cost estimate (padded shapes, bf16 operands, f32 output).
    flops = sum(2 * B * w.shape[0] * w.shape[1] for w, _ in prepped_params)
    param_bytes = sum(w.size * w.dtype.itemsize + b.size * b.dtype.itemsize
                      for w, b in prepped_params)
    bytes_accessed = B * k0_pad * 2 + param_bytes + B * n_out * 4
    transcendentals = B * (n_out + 1)  # exp per logit + log per row

    # Defensive scoped-VMEM limit: double-buffered x tiles + output tiles +
    # resident weights, with 2x headroom (matters on v5e's 16 MiB default).
    need = (2 * block_b * k0_pad * 2        # x double buffer (bf16)
            + 2 * block_b * n_out * 4       # output double buffer (f32)
            + param_bytes)
    vmem_limit = min(max(2 * need + (4 << 20), 16 << 20), 48 << 20)

    kernel = _make_fused_mlp_kernel(num_layers)

    flat_args = [x_bf]
    for w, b in prepped_params:
        flat_args += [w, b]

    return pl.pallas_call(
        kernel,
        out_shape=jax.ShapeDtypeStruct((B, n_out), jnp.float32),
        grid_spec=pltpu.PrefetchScalarGridSpec(
            num_scalar_prefetch=0,
            grid=grid,
            in_specs=in_specs,
            out_specs=out_specs,
        ),
        compiler_params=pltpu.CompilerParams(
            dimension_semantics=("parallel",),
            vmem_limit_bytes=int(vmem_limit)),
        cost_estimate=pl.CostEstimate(
            flops=flops,
            transcendentals=transcendentals,
            bytes_accessed=bytes_accessed),
    )(*flat_args)


# ---------------------------------------------------------------------------
# Parameter init (deterministic, PyTorch nn.Linear-style uniform init)
# ---------------------------------------------------------------------------

def init_fc_net_params(key, input_size, hidden_sizes, output_size):
    params = []
    sizes = [input_size] + list(hidden_sizes) + [output_size]
    for fan_in, fan_out in zip(sizes[:-1], sizes[1:]):
        key, kw, kb = jax.random.split(key, 3)
        bound = 1.0 / math.sqrt(fan_in)
        # stored as (in, out) so the kernel computes x @ W
        w = jax.random.uniform(kw, (fan_in, fan_out), jnp.float32, -bound, bound)
        b = jax.random.uniform(kb, (1, fan_out), jnp.float32, -bound, bound)
        params.append((w, b))
    return params


# ---------------------------------------------------------------------------
# Pure-JAX reference (identical bf16-operand / f32-accumulate / bf16-hidden math)
# ---------------------------------------------------------------------------

def fc_net_forward_ref(params, x):
    h = x.astype(MATMUL_DTYPE)
    for w, b in params[:-1]:
        y = jnp.dot(h, w.astype(MATMUL_DTYPE),
                    preferred_element_type=jnp.float32) + b
        h = jnp.maximum(y, 0.0).astype(MATMUL_DTYPE)
    w, b = params[-1]
    y = jnp.dot(h, w.astype(MATMUL_DTYPE),
                preferred_element_type=jnp.float32) + b
    return jax.nn.log_softmax(y, axis=1)


# ---------------------------------------------------------------------------
# Main
# ---------------------------------------------------------------------------

if __name__ == "__main__":
    input_size = 128
    hidden_sizes = [64, 32]
    output_size = 10
    batch = 8

    key = jax.random.PRNGKey(0)
    key, kx = jax.random.split(key)
    x = jax.random.normal(kx, (batch, input_size), jnp.float32)

    params = init_fc_net_params(key, input_size, hidden_sizes, output_size)
    prepped = prepare_params(params)          # pad + cast once, outside the hot path

    fwd = jax.jit(fc_net_forward)
    out = fwd(prepped, x)
    out = jax.block_until_ready(out)

    ref = fc_net_forward_ref(params, x)
    assert out.shape == (batch, output_size)
    assert jnp.allclose(out, ref, atol=1e-4, rtol=1e-4), "mismatch vs reference"
    # log_softmax rows must sum to 1 in prob space
    assert jnp.allclose(jnp.exp(out).sum(axis=1), 1.0, atol=1e-4)

    print("KERNEL_OK")
</pallas_src>

<mosaic_0001>
module attributes {stable_mosaic.version = 11 : i64} {
  func.func @kernel(%arg0: i32, %arg1: memref<8x128xbf16, #tpu.memory_space<vmem>>, %arg2: memref<128x128xbf16, #tpu.memory_space<vmem>>, %arg3: memref<1x128xf32, #tpu.memory_space<vmem>>, %arg4: memref<128x128xbf16, #tpu.memory_space<vmem>>, %arg5: memref<1x128xf32, #tpu.memory_space<vmem>>, %arg6: memref<128x10xbf16, #tpu.memory_space<vmem>>, %arg7: memref<1x10xf32, #tpu.memory_space<vmem>>, %arg8: memref<8x10xf32, #tpu.memory_space<vmem>>) attributes {dimension_semantics = [#tpu.dimension_semantics<parallel>], iteration_bounds = array<i64: 1>, scalar_prefetch = 0 : i64, scratch_operands = 0 : i64, tpu.core_type = #tpu.core_type<tc>, window_params = [{transform_indices = @transform_0, window_bounds = array<i64: 8, 128>}, {pipeline_mode = #tpu.pipeline_mode<synchronous>, transform_indices = @transform_1, window_bounds = array<i64: 128, 128>}, {pipeline_mode = #tpu.pipeline_mode<synchronous>, transform_indices = @transform_2, window_bounds = array<i64: 1, 128>}, {pipeline_mode = #tpu.pipeline_mode<synchronous>, transform_indices = @transform_3, window_bounds = array<i64: 128, 128>}, {pipeline_mode = #tpu.pipeline_mode<synchronous>, transform_indices = @transform_4, window_bounds = array<i64: 1, 128>}, {pipeline_mode = #tpu.pipeline_mode<synchronous>, transform_indices = @transform_5, window_bounds = array<i64: 128, 10>}, {pipeline_mode = #tpu.pipeline_mode<synchronous>, transform_indices = @transform_6, window_bounds = array<i64: 1, 10>}, {transform_indices = @transform_7, window_bounds = array<i64: 8, 10>}]} {
    %c0 = arith.constant 0 : index
    %c0_0 = arith.constant 0 : index
    %0 = vector.load %arg1[%c0, %c0_0] : memref<8x128xbf16, #tpu.memory_space<vmem>>, vector<8x128xbf16>
    %c0_1 = arith.constant 0 : index
    %c0_2 = arith.constant 0 : index
    %1 = vector.load %arg2[%c0_1, %c0_2] : memref<128x128xbf16, #tpu.memory_space<vmem>>, vector<128x128xbf16>
    %cst = arith.constant dense<0.000000e+00> : vector<8x128xf32>
    %2 = tpu.matmul %0, %1, %cst {dimension_numbers = #tpu.dot_dimension_numbers<[1], [0], [0], [1], [0, 0, 1, 1], [], []>} : vector<8x128xbf16>, vector<128x128xbf16>, vector<8x128xf32> -> vector<8x128xf32>
    %c0_3 = arith.constant 0 : index
    %c0_4 = arith.constant 0 : index
    %3 = vector.load %arg3[%c0_3, %c0_4] : memref<1x128xf32, #tpu.memory_space<vmem>>, vector<1x128xf32>
    %4 = vector.broadcast %3 : vector<1x128xf32> to vector<8x128xf32>
    %5 = arith.addf %2, %4 : vector<8x128xf32>
    %cst_5 = arith.constant 0.000000e+00 : f32
    %6 = vector.broadcast %cst_5 : f32 to vector<8x128xf32>
    %7 = arith.maximumf %5, %6 : vector<8x128xf32>
    %8 = arith.truncf %7 : vector<8x128xf32> to vector<8x128xbf16>
    %c0_6 = arith.constant 0 : index
    %c0_7 = arith.constant 0 : index
    %9 = vector.load %arg4[%c0_6, %c0_7] : memref<128x128xbf16, #tpu.memory_space<vmem>>, vector<128x128xbf16>
    %cst_8 = arith.constant dense<0.000000e+00> : vector<8x128xf32>
    %10 = tpu.matmul %8, %9, %cst_8 {dimension_numbers = #tpu.dot_dimension_numbers<[1], [0], [0], [1], [0, 0, 1, 1], [], []>} : vector<8x128xbf16>, vector<128x128xbf16>, vector<8x128xf32> -> vector<8x128xf32>
    %c0_9 = arith.constant 0 : index
    %c0_10 = arith.constant 0 : index
    %11 = vector.load %arg5[%c0_9, %c0_10] : memref<1x128xf32, #tpu.memory_space<vmem>>, vector<1x128xf32>
    %12 = vector.broadcast %11 : vector<1x128xf32> to vector<8x128xf32>
    %13 = arith.addf %10, %12 : vector<8x128xf32>
    %cst_11 = arith.constant 0.000000e+00 : f32
    %14 = vector.broadcast %cst_11 : f32 to vector<8x128xf32>
    %15 = arith.maximumf %13, %14 : vector<8x128xf32>
    %16 = arith.truncf %15 : vector<8x128xf32> to vector<8x128xbf16>
    %c0_12 = arith.constant 0 : index
    %c0_13 = arith.constant 0 : index
    %17 = vector.load %arg6[%c0_12, %c0_13] : memref<128x10xbf16, #tpu.memory_space<vmem>>, vector<128x10xbf16>
    %cst_14 = arith.constant dense<0.000000e+00> : vector<8x10xf32>
    %18 = tpu.matmul %16, %17, %cst_14 {dimension_numbers = #tpu.dot_dimension_numbers<[1], [0], [0], [1], [0, 0, 1, 1], [], []>} : vector<8x128xbf16>, vector<128x10xbf16>, vector<8x10xf32> -> vector<8x10xf32>
    %c0_15 = arith.constant 0 : index
    %c0_16 = arith.constant 0 : index
    %19 = vector.load %arg7[%c0_15, %c0_16] : memref<1x10xf32, #tpu.memory_space<vmem>>, vector<1x10xf32>
    %20 = vector.broadcast %19 : vector<1x10xf32> to vector<8x10xf32>
    %21 = arith.addf %18, %20 : vector<8x10xf32>
    %cst_17 = arith.constant dense<0xFF800000> : vector<8xf32>
    %22 = vector.multi_reduction <maximumf>, %21, %cst_17 [1] : vector<8x10xf32> to vector<8xf32>
    %23 = vector.shape_cast %22 : vector<8xf32> to vector<8x1xf32>
    %24 = vector.broadcast %23 : vector<8x1xf32> to vector<8x10xf32>
    %25 = arith.subf %21, %24 : vector<8x10xf32>
    %26 = math.exp %25 : vector<8x10xf32>
    %cst_18 = arith.constant dense<0.000000e+00> : vector<8xf32>
    %27 = vector.multi_reduction <add>, %26, %cst_18 [1] : vector<8x10xf32> to vector<8xf32>
    %28 = vector.shape_cast %27 : vector<8xf32> to vector<8x1xf32>
    %29 = math.log %28 : vector<8x1xf32>
    %30 = vector.broadcast %29 : vector<8x1xf32> to vector<8x10xf32>
    %31 = arith.subf %25, %30 : vector<8x10xf32>
    %c0_19 = arith.constant 0 : index
    %c0_20 = arith.constant 0 : index
    %32 = vector.load %arg8[%c0_19, %c0_20] : memref<8x10xf32, #tpu.memory_space<vmem>>, vector<8x10xf32>
    tpu.vector_store %arg8[%c0_19, %c0_20], %31 {strides = array<i32>} : memref<8x10xf32, #tpu.memory_space<vmem>>, vector<8x10xf32>,
    return
  }
  func.func @transform_0(%arg0: i32) -> (i32, i32) {
    %c0_i32 = arith.constant 0 : i32
    %c0_i32_0 = arith.constant 0 : i32
    return %arg0, %c0_i32 : i32, i32
  }
  func.func @transform_1(%arg0: i32) -> (i32, i32) {
    %c0_i32 = arith.constant 0 : i32
    %c0_i32_0 = arith.constant 0 : i32
    %c0_i32_1 = arith.constant 0 : i32
    return %c0_i32, %c0_i32_0 : i32, i32
  }
  func.func @transform_2(%arg0: i32) -> (i32, i32) {
    %c0_i32 = arith.constant 0 : i32
    %c0_i32_0 = arith.constant 0 : i32
    %c0_i32_1 = arith.constant 0 : i32
    return %c0_i32, %c0_i32_0 : i32, i32
  }
  func.func @transform_3(%arg0: i32) -> (i32, i32) {
    %c0_i32 = arith.constant 0 : i32
    %c0_i32_0 = arith.constant 0 : i32
    %c0_i32_1 = arith.constant 0 : i32
    return %c0_i32, %c0_i32_0 : i32, i32
  }
  func.func @transform_4(%arg0: i32) -> (i32, i32) {
    %c0_i32 = arith.constant 0 : i32
    %c0_i32_0 = arith.constant 0 : i32
    %c0_i32_1 = arith.constant 0 : i32
    return %c0_i32, %c0_i32_0 : i32, i32
  }
  func.func @transform_5(%arg0: i32) -> (i32, i32) {
    %c0_i32 = arith.constant 0 : i32
    %c0_i32_0 = arith.constant 0 : i32
    %c0_i32_1 = arith.constant 0 : i32
    return %c0_i32, %c0_i32_0 : i32, i32
  }
  func.func @transform_6(%arg0: i32) -> (i32, i32) {
    %c0_i32 = arith.constant 0 : i32
    %c0_i32_0 = arith.constant 0 : i32
    %c0_i32_1 = arith.constant 0 : i32
    return %c0_i32, %c0_i32_0 : i32, i32
  }
  func.func @transform_7(%arg0: i32) -> (i32, i32) {
    %c0_i32 = arith.constant 0 : i32
    %c0_i32_0 = arith.constant 0 : i32
    return %arg0, %c0_i32 : i32, i32
  }
}

</mosaic_0001>

<llo_original>
// kernel: fc_net_forward.1
$region0: #{fc_net_forward.1}
  #allocation0 [shape = 'u32[]', space=smem, size = 0x4, offset = 0x4, fixed_abs, tag = 'smem constant byte address 0x4 - core index']
  #allocation1 [shape = 'u32[72,128]{1,0:T(1,128)}', space=vmem, size = 0x9000, scoped, tag = 'internal scratch']
  %s0 = inlined_call_operand.vmem [shape: bf16[8,128], index: 0, kind: input, shape index: {}]
  %s1 = inlined_call_operand.vmem [shape: bf16[128,128], index: 1, kind: input, shape index: {}]
  %s2 = inlined_call_operand.vmem [shape: f32[1,128], index: 2, kind: input, shape index: {}]
  %s3 = inlined_call_operand.hbm [shape: bf16[128,128], index: 3, kind: input, shape index: {}]
  %s4 = inlined_call_operand.vmem [shape: f32[1,128], index: 4, kind: input, shape index: {}]
  %s5 = inlined_call_operand.vmem [shape: bf16[128,10], index: 5, kind: input, shape index: {}]
  %s6 = inlined_call_operand.vmem [shape: f32[1,10], index: 6, kind: input, shape index: {}]
  %s7 = inlined_call_operand.hbm [shape: f32[8,10], index: 7, kind: output, shape index: {}]
  %s8 = sld [smem:[#allocation0]]
  $region42: #{fc_net_forward.1} parent=0
    _
  %s10 = ssub.s32 1, %s8
  %s11 = scalar_select 0, %s10, %s8
  $region1: #{fc_net_forward.1} parent=0
    #allocation2 [shape = 'u8[32768]{0}', space=vmem, size = 0x8000, scoped, tag = 'input window, operand 3, single buffered']
    #allocation3 [shape = 's32[1]{0}', space=sflag, size = 0x4, scoped, tag = 'scoped memory for fc_net_forward.1']
    #allocation4 [shape = 's32[1]{0}', space=sflag, size = 0x4, scoped, tag = 'scoped memory for fc_net_forward.1']
    #allocation5 [shape = 'u8[4096]{0}', space=vmem, size = 0x1000, scoped, tag = 'output window, operand 0, single buffered']
    %12 = vsyncpa [#allocation3], 0
    %13 = vsyncpa [#allocation4], 0
    // Predicated region
    $region2: #{fc_net_forward.1} parent=1 // pred_check
      _
    $region3: #{fc_net_forward.1} parent=1 // pred_check_branch
      %15 = sbr.rel (0) target = $region5
    $region4: #{fc_net_forward.1} parent=1 // pred_region
      _
    $region5: #{fc_net_forward.1} parent=1 // pred_fallthru
      _
    // Predicated region
    $region6: #{fc_net_forward.1} parent=1 // pred_check
      _
    $region7: #{fc_net_forward.1} parent=1 // pred_check_branch
      %17 = sbr.rel (0) target = $region9
    $region8: #{fc_net_forward.1} parent=1 // pred_region
      _
    $region9: #{fc_net_forward.1} parent=1 // pred_fallthru
      _
    // Predicated region
    $region10: #{fc_net_forward.1} parent=1 // pred_check
      _
    $region11: #{fc_net_forward.1} parent=1 // pred_check_branch
      %19 = sbr.rel (0) target = $region13
    $region12: #{fc_net_forward.1} parent=1 // pred_region
      _
    $region13: #{fc_net_forward.1} parent=1 // pred_fallthru
      _
    // Predicated region
    $region14: #{fc_net_forward.1} parent=1 // pred_check
      _
    $region15: #{fc_net_forward.1} parent=1 // pred_check_branch
      %21 = sbr.rel (0) target = $region17
    $region16: #{fc_net_forward.1} parent=1 // pred_region
      %23 = vsyncadd [#allocation3], 0
      %s24 = sshll.u32 %s3, 4
      %s25 = int_to_ptr.hbm [resolvable:$true] %s24
      %s26 = sshll.u32 [#allocation2], 4
      %s27 = int_to_ptr.vmem [resolvable:$true] %s26
      %32 = dma.hbm_to_vmem [thread:$0]  %s25, 1024, %s27, [#allocation3], 64, 64, 4
    $region17: #{fc_net_forward.1} parent=1 // pred_fallthru
      _
    // Predicated region
    $region18: #{fc_net_forward.1} parent=1 // pred_check
      _
    $region19: #{fc_net_forward.1} parent=1 // pred_check_branch
      %34 = sbr.rel (0) target = $region21
    $region20: #{fc_net_forward.1} parent=1 // pred_region
      _
    $region21: #{fc_net_forward.1} parent=1 // pred_fallthru
      _
    // Predicated region
    $region22: #{fc_net_forward.1} parent=1 // pred_check
      _
    $region23: #{fc_net_forward.1} parent=1 // pred_check_branch
      %36 = sbr.rel (0) target = $region25
    $region24: #{fc_net_forward.1} parent=1 // pred_region
      _
    $region25: #{fc_net_forward.1} parent=1 // pred_fallthru
      _
    // Predicated region
    $region26: #{fc_net_forward.1} parent=1 // pred_check
      _
    $region27: #{fc_net_forward.1} parent=1 // pred_check_branch
      %38 = sbr.rel (0) target = $region29
    $region28: #{fc_net_forward.1} parent=1 // pred_region
      _
    $region29: #{fc_net_forward.1} parent=1 // pred_fallthru
      _
    // Predicated region
    $region30: #{fc_net_forward.1} parent=1 // pred_check
      _
    $region31: #{fc_net_forward.1} parent=1 // pred_check_branch
      %40 = sbr.rel (0) target = $region33
    $region32: #{fc_net_forward.1} parent=1 // pred_region
      %42 = dma.done [#allocation3], 1024
    $region33: #{fc_net_forward.1} parent=1 // pred_fallthru
      _
    %v43 = vld [vmem:[%s0] sm:$0xf]
    %v44 = vld [vmem:[%s1] sm:$0xf]
    %v45 = vld [vmem:[%s1 + $0x4] sm:$0xf]
    %v46 = vld [vmem:[%s1 + $0x8] sm:$0xf]
    %v47 = vld [vmem:[%s1 + $0xc] sm:$0xf]
    %v48 = vld [vmem:[%s1 + $0x10] sm:$0xf]
    %v49 = vld [vmem:[%s1 + $0x14] sm:$0xf]
    %v50 = vld [vmem:[%s1 + $0x18] sm:$0xf]
    %v51 = vld [vmem:[%s1 + $0x1c] sm:$0xf]
    %v52 = vld [vmem:[%s1 + $0x20] sm:$0xf]
    %v53 = vld [vmem:[%s1 + $0x24] sm:$0xf]
    %v54 = vld [vmem:[%s1 + $0x28] sm:$0xf]
    %v55 = vld [vmem:[%s1 + $0x2c] sm:$0xf]
    %v56 = vld [vmem:[%s1 + $0x30] sm:$0xf]
    %v57 = vld [vmem:[%s1 + $0x34] sm:$0xf]
    %v58 = vld [vmem:[%s1 + $0x38] sm:$0xf]
    %v59 = vld [vmem:[%s1 + $0x3c] sm:$0xf]
    %v60 = vld [vmem:[%s2] sm:$0x1]
    %v62 = vperm.slane %v60, 0
    %v80 = vunpack.c.l.b16 %v44
    %v81 = vunpack.c.l.b16 %v45
    %v82 = vunpack.c.l.b16 %v46
    %v83 = vunpack.c.l.b16 %v47
    %v84 = vunpack.c.l.b16 %v48
    %v85 = vunpack.c.l.b16 %v49
    %v86 = vunpack.c.l.b16 %v50
    %v87 = vunpack.c.l.b16 %v51
    %v88 = vunpack.c.l.b16 %v52
    %v89 = vunpack.c.l.b16 %v53
    %v90 = vunpack.c.l.b16 %v54
    %v91 = vunpack.c.l.b16 %v55
    %v92 = vunpack.c.l.b16 %v56
    %v93 = vunpack.c.l.b16 %v57
    %v94 = vunpack.c.l.b16 %v58
    %v95 = vunpack.c.l.b16 %v59
    %v96 = vpack.c.b16 %v81, %v80
    %v97 = vpack.c.b16 %v83, %v82
    %v98 = vpack.c.b16 %v85, %v84
    %v99 = vpack.c.b16 %v87, %v86
    %v100 = vpack.c.b16 %v89, %v88
    %v101 = vpack.c.b16 %v91, %v90
    %v102 = vpack.c.b16 %v93, %v92
    %v103 = vpack.c.b16 %v95, %v94
    %112 = vmatpush.bf16.msra.mxu0 %v103
    %113 = vmatpush.bf16.msra.mxu0 %v102
    %114 = vmatpush.bf16.msra.mxu0 %v101
    %115 = vmatpush.bf16.msra.mxu0 %v100
    %116 = vmatpush.bf16.msra.mxu0 %v99
    %117 = vmatpush.bf16.msra.mxu0 %v98
    %118 = vmatpush.bf16.msra.mxu0 %v97
    %119 = vmatpush.bf16.msra.mxu0 %v96
    %120 = vmatmul.bf16.gmra.mxu0 %v43
    %v121 = vpop.f32.mrf.mxu0
    %v122 = vadd.f32 %v62, %v121
    %v123 = vpop.f32.mrf.mxu0
    %124 = vdwg.mxu0
    %v125 = vmax.f32 %v122, 0.0
    %v126 = vpack.c.bf16 %v125, %v125
    %v127 = vld [vmem:[#allocation2] sm:$0xf]
    %v128 = vld [vmem:[#allocation2 + $0x4] sm:$0xf]
    %v129 = vld [vmem:[#allocation2 + $0x8] sm:$0xf]
    %v130 = vld [vmem:[#allocation2 + $0xc] sm:$0xf]
    %v131 = vld [vmem:[#allocation2 + $0x10] sm:$0xf]
    %v132 = vld [vmem:[#allocation2 + $0x14] sm:$0xf]
    %v133 = vld [vmem:[#allocation2 + $0x18] sm:$0xf]
    %v134 = vld [vmem:[#allocation2 + $0x1c] sm:$0xf]
    %v135 = vld [vmem:[#allocation2 + $0x20] sm:$0xf]
    %v136 = vld [vmem:[#allocation2 + $0x24] sm:$0xf]
    %v137 = vld [vmem:[#allocation2 + $0x28] sm:$0xf]
    %v138 = vld [vmem:[#allocation2 + $0x2c] sm:$0xf]
    %v139 = vld [vmem:[#allocation2 + $0x30] sm:$0xf]
    %v140 = vld [vmem:[#allocation2 + $0x34] sm:$0xf]
    %v141 = vld [vmem:[#allocation2 + $0x38] sm:$0xf]
    %v142 = vld [vmem:[#allocation2 + $0x3c] sm:$0xf]
    %v143 = vld [vmem:[%s4] sm:$0x1]
    %v145 = vperm.slane %v143, 0
    %v163 = vunpack.c.l.b16 %v127
    %v164 = vunpack.c.l.b16 %v128
    %v165 = vunpack.c.l.b16 %v129
    %v166 = vunpack.c.l.b16 %v130
    %v167 = vunpack.c.l.b16 %v131
    %v168 = vunpack.c.l.b16 %v132
    %v169 = vunpack.c.l.b16 %v133
    %v170 = vunpack.c.l.b16 %v134
    %v171 = vunpack.c.l.b16 %v135
    %v172 = vunpack.c.l.b16 %v136
    %v173 = vunpack.c.l.b16 %v137
    %v174 = vunpack.c.l.b16 %v138
    %v175 = vunpack.c.l.b16 %v139
    %v176 = vunpack.c.l.b16 %v140
    %v177 = vunpack.c.l.b16 %v141
    %v178 = vunpack.c.l.b16 %v142
    %v179 = vpack.c.b16 %v164, %v163
    %v180 = vpack.c.b16 %v166, %v165
    %v181 = vpack.c.b16 %v168, %v167
    %v182 = vpack.c.b16 %v170, %v169
    %v183 = vpack.c.b16 %v172, %v171
    %v184 = vpack.c.b16 %v174, %v173
    %v185 = vpack.c.b16 %v176, %v175
    %v186 = vpack.c.b16 %v178, %v177
    %195 = vmatpush.bf16.msra.mxu0 %v186
    %196 = vmatpush.bf16.msra.mxu0 %v185
    %197 = vmatpush.bf16.msra.mxu0 %v184
    %198 = vmatpush.bf16.msra.mxu0 %v183
    %199 = vmatpush.bf16.msra.mxu0 %v182
    %200 = vmatpush.bf16.msra.mxu0 %v181
    %201 = vmatpush.bf16.msra.mxu0 %v180
    %202 = vmatpush.bf16.msra.mxu0 %v179
    %203 = vmatmul.bf16.gmra.mxu0 %v126
    %v204 = vpop.f32.mrf.mxu0
    %v205 = vadd.f32 %v145, %v204
    %v206 = vpop.f32.mrf.mxu0
    %207 = vdwg.mxu0
    %v208 = vmax.f32 %v205, 0.0
    %v209 = vpack.c.bf16 %v208, %v208
    %v210 = vld [vmem:[%s5] sm:$0xf]
    %v211 = vld [vmem:[%s5 + $0x4] sm:$0xf]
    %v212 = vld [vmem:[%s5 + $0x8] sm:$0xf]
    %v213 = vld [vmem:[%s5 + $0xc] sm:$0xf]
    %v214 = vld [vmem:[%s5 + $0x10] sm:$0xf]
    %v215 = vld [vmem:[%s5 + $0x14] sm:$0xf]
    %v216 = vld [vmem:[%s5 + $0x18] sm:$0xf]
    %v217 = vld [vmem:[%s5 + $0x1c] sm:$0xf]
    %v218 = vld [vmem:[%s5 + $0x20] sm:$0xf]
    %v219 = vld [vmem:[%s5 + $0x24] sm:$0xf]
    %v220 = vld [vmem:[%s5 + $0x28] sm:$0xf]
    %v221 = vld [vmem:[%s5 + $0x2c] sm:$0xf]
    %v222 = vld [vmem:[%s5 + $0x30] sm:$0xf]
    %v223 = vld [vmem:[%s5 + $0x34] sm:$0xf]
    %v224 = vld [vmem:[%s5 + $0x38] sm:$0xf]
    %v225 = vld [vmem:[%s5 + $0x3c] sm:$0xf]
    %v226 = vld [vmem:[%s6] sm:$0x1]
    %v228 = vperm.slane %v226, 0
    %v246 = vunpack.c.l.b16 %v210
    %v247 = vunpack.c.l.b16 %v211
    %v248 = vunpack.c.l.b16 %v212
    %v249 = vunpack.c.l.b16 %v213
    %v250 = vunpack.c.l.b16 %v214
    %v251 = vunpack.c.l.b16 %v215
    %v252 = vunpack.c.l.b16 %v216
    %v253 = vunpack.c.l.b16 %v217
    %v254 = vunpack.c.l.b16 %v218
    %v255 = vunpack.c.l.b16 %v219
    %v256 = vunpack.c.l.b16 %v220
    %v257 = vunpack.c.l.b16 %v221
    %v258 = vunpack.c.l.b16 %v222
    %v259 = vunpack.c.l.b16 %v223
    %v260 = vunpack.c.l.b16 %v224
    %v261 = vunpack.c.l.b16 %v225
    %v262 = vpack.c.b16 %v247, %v246
    %v263 = vpack.c.b16 %v249, %v248
    %v264 = vpack.c.b16 %v251, %v250
    %v265 = vpack.c.b16 %v253, %v252
    %v266 = vpack.c.b16 %v255, %v254
    %v267 = vpack.c.b16 %v257, %v256
    %v268 = vpack.c.b16 %v259, %v258
    %v269 = vpack.c.b16 %v261, %v260
    %278 = vmatpush.bf16.msra.mxu0 %v269
    %279 = vmatpush.bf16.msra.mxu0 %v268
    %280 = vmatpush.bf16.msra.mxu0 %v267
    %281 = vmatpush.bf16.msra.mxu0 %v266
    %282 = vmatpush.bf16.msra.mxu0 %v265
    %283 = vmatpush.bf16.msra.mxu0 %v264
    %284 = vmatpush.bf16.msra.mxu0 %v263
    %285 = vmatpush.bf16.msra.mxu0 %v262
    %286 = vmatmul.bf16.gmra.mxu0 %v209
    %v287 = vpop.f32.mrf.mxu0
    %v288 = vadd.f32 %v228, %v287
    %v289 = vpop.f32.mrf.mxu0
    %290 = vdwg.mxu0
    %vm291 = vcmask 80896
    %v292 = vsel %vm291, %v288, -inf
    %293 = vmax.xlane.f32.xlu0 %v292
    %v294 = vpop.xlane.xlu0 %293
    %v295 = vsub.f32 %v288, %v294
    %v296 = vmul.f32 %v295, 1.442695
    %v297 = vpow.pop %v296
    %v298 = vsel %vm291, %v297, 0.0
    %299 = vadd.xlane.f32.xlu0 %v298
    %v300 = vpop.xlane.xlu0 %299
    %v301 = vlog2.pop %v300
    %v302 = vmul.f32 %v301, 0.6931472
    %v303 = vsub.f32 %v295, %v302
    %304 = vst.msk [vmem:[#allocation5] sm:$0xff] %vm291, %v303
    // Predicated region
    $region34: #{fc_net_forward.1} parent=1 // pred_check
      _
    $region35: #{fc_net_forward.1} parent=1 // pred_check_branch
      %306 = sbr.rel (0) target = $region37
    $region36: #{fc_net_forward.1} parent=1 // pred_region
      %308 = vsyncadd [#allocation4], 0
      %s310 = sshll.u32 [#allocation5], 4
      %s311 = int_to_ptr.vmem [resolvable:$true] %s310
      %s312 = sshll.u32 %s7, 4
      %s313 = int_to_ptr.hbm [resolvable:$true] %s312
      %315 = dma.vmem_to_hbm [thread:$0]  %s311, 128, %s313, [#allocation4]
    $region37: #{fc_net_forward.1} parent=1 // pred_fallthru
      _
    // Predicated region
    $region38: #{fc_net_forward.1} parent=1 // pred_check
      _
    $region39: #{fc_net_forward.1} parent=1 // pred_check_branch
      %317 = sbr.rel (0) target = $region41
    $region40: #{fc_net_forward.1} parent=1 // pred_region
      %319 = dma.done [#allocation4], 128
    $region41: #{fc_net_forward.1} parent=1 // pred_fallthru
      _
    %320 = vsyncpa [#allocation3], 1
    %321 = vsyncpa [#allocation4], 1

</llo_original>
